<compile_context>
chip_gen: v5e
topology: v5e:2x2
jax: 0.10.0
libtpu: 0.0.40
codegen_flags: <defaults>
</compile_context>

<pallas_src>
import functools

import numpy as np
import jax
import jax.numpy as jnp
from jax.experimental import pallas as pl
from jax.experimental.pallas import tpu as pltpu

# (group_width, 5) projection matrices i = 1..24; widths match the slices in
# the PyTorch forward.
GROUP_WIDTHS = [32, 64, 32, 64,
                256, 256, 256, 256, 256,
                2, 2, 2, 2,
                256, 256, 256, 256,
                4, 128, 4, 128,
                256, 256, 256]
PROJ_DIM = 5
FEAT = sum(GROUP_WIDTHS)                  # 3536
OUT_FEAT = len(GROUP_WIDTHS) * PROJ_DIM   # 120
OUT_PAD = 128                             # lane-dense padded output width

MAX_TM = 2048                             # row-tile cap (VMEM budget may lower it)


def _cdiv(a, b):
    return (a + b - 1) // b


def _round_up(x, m):
    return _cdiv(x, m) * m


def _make_params(key):
    """Deterministic stand-ins for torch.randn projection matrices."""
    keys = jax.random.split(key, len(GROUP_WIDTHS))
    return [jax.random.normal(k, (w, PROJ_DIM), dtype=jnp.float32)
            for k, w in zip(keys, GROUP_WIDTHS)]


def _block_diag_weight_padded(proj_mats, dtype=jnp.float32):
    """(FEAT, OUT_PAD) block-diagonal weight; last 8 columns are zeros.

    Built ONCE at parameter-init time (host-side), not per forward call.
    """
    w = np.zeros((FEAT, OUT_PAD), dtype=np.float32)
    row = 0
    for i, pm in enumerate(proj_mats):
        gw = pm.shape[0]
        w[row:row + gw, i * PROJ_DIM:(i + 1) * PROJ_DIM] = np.asarray(pm)
        row += gw
    return jnp.asarray(w, dtype=dtype)


# ------------------------- tiling / VMEM heuristics -------------------------

def _vmem_limit_bytes():
    """Scoped-VMEM budget: ~3/4 of physical VMEM, capped at 96 MiB."""
    cap = None
    try:
        cap = getattr(pltpu.get_tpu_info(), "vmem_capacity_bytes", None)
    except Exception:
        cap = None
    if not cap:
        cap = 64 * 1024 * 1024            # conservative: v7x per-TC VMEM
    return int(min(cap * 3 // 4, 96 * 1024 * 1024))


def _pick_tm(M, x_itemsize, vmem_limit):
    """Largest sublane-aligned row tile that fits the VMEM budget."""
    sub = 8 if x_itemsize >= 4 else 16            # sublane packing granularity
    # Per-row cost: double-buffered X tile + double-buffered f32 out tile.
    per_row = 2 * FEAT * x_itemsize + 2 * OUT_PAD * 4
    w_bytes = 2 * FEAT * OUT_PAD * x_itemsize     # double-buffered weight
    headroom = 8 * 1024 * 1024                    # compiler-internal scratch
    budget = max(vmem_limit - w_bytes - headroom, per_row * sub)
    tm = min((budget // per_row) // sub * sub, MAX_TM)
    tm = max(tm, sub)
    # Never bigger than the (aligned) problem ...
    tm = min(tm, _round_up(M, sub))
    # ... but split a large single-tile M in two so the "parallel" grid axis
    # can keep both v7x TensorCores busy (harmless extra step on 1-TC chips).
    if M > 1024 and tm >= M:
        tm = _round_up(_cdiv(M, 2), sub)
    return int(tm)


# ------------------------------ Pallas kernel -------------------------------

def _proj_kernel(x_ref, w_ref, o_ref):
    # One MXU matmul per row tile: (tm, FEAT) @ (FEAT, OUT_PAD), f32 accum.
    o_ref[...] = jnp.dot(
        x_ref[...], w_ref[...], preferred_element_type=jnp.float32
    ).astype(o_ref.dtype)


def _projection_matmul(x2d, w_pad, tm, vmem_limit):
    """x2d: (M, FEAT), w_pad: (FEAT, OUT_PAD) -> (M, OUT_PAD) f32.

    Ragged last row tile (M % tm != 0) is handled by Pallas masking; OOB X
    rows only feed OOB output rows, which are never stored.
    """
    m = x2d.shape[0]
    grid_m = _cdiv(m, tm)
    return pl.pallas_call(
        _proj_kernel,
        out_shape=jax.ShapeDtypeStruct((m, OUT_PAD), jnp.float32),
        grid_spec=pltpu.PrefetchScalarGridSpec(
            num_scalar_prefetch=0,
            grid=(grid_m,),
            in_specs=[
                # X: one (tm, FEAT) row tile per grid step (double-buffered).
                pl.BlockSpec((tm, FEAT), lambda i: (i, 0)),
                # W: constant block index -> stays VMEM-resident across tiles.
                pl.BlockSpec((FEAT, OUT_PAD), lambda i: (0, 0)),
            ],
            out_specs=pl.BlockSpec((tm, OUT_PAD), lambda i: (i, 0)),
        ),
        compiler_params=pltpu.CompilerParams(
            dimension_semantics=("parallel",),
            vmem_limit_bytes=vmem_limit,
        ),
    )(x2d, w_pad)


@jax.jit
def _embedding_forward_impl(X, w_pad):
    batch, seq, feat = X.shape
    M = batch * seq
    x2d = X.reshape(M, FEAT)

    # Stream X in its native dtype (never materialize a casted copy of X in
    # HBM); the tiny weight is cast to match so bf16 X gets bf16 streaming.
    w = w_pad if w_pad.dtype == X.dtype else w_pad.astype(X.dtype)

    vmem_limit = _vmem_limit_bytes()
    tm = _pick_tm(M, jnp.dtype(X.dtype).itemsize, vmem_limit)

    out = _projection_matmul(x2d, w, tm, vmem_limit)
    return out[:, :OUT_FEAT].reshape(batch, seq, OUT_FEAT)


def embedding_forward(X, w_pad):
    """X: (batch, seq, FEAT) f32 or bf16; w_pad: prebuilt (FEAT, OUT_PAD).

    Returns (batch, seq, OUT_FEAT) f32.
    """
    batch, seq, feat = X.shape
    assert feat == FEAT
    return _embedding_forward_impl(X, w_pad)


# Pure-JAX reference mirroring the PyTorch forward (slice + matmul + concat).
def embedding_ref(X, proj_mats):
    outs = []
    off = 0
    for pm in proj_mats:
        w = pm.shape[0]
        outs.append(X[:, :, off:off + w] @ pm)
        off += w
    return jnp.concatenate(outs, axis=-1)


if __name__ == "__main__":
    key = jax.random.PRNGKey(0)
    kp, kx = jax.random.split(key)
    proj_mats = _make_params(kp)

    batch, seq = 2, 8
    X = jax.random.normal(kx, (batch, seq, FEAT), dtype=jnp.float32)

    # --- f32 path (matches the PyTorch forward numerically) ---
    W_f32 = jax.block_until_ready(_block_diag_weight_padded(proj_mats,
                                                            jnp.float32))
    out_f32 = jax.block_until_ready(embedding_forward(X, W_f32))
    ref_f32 = embedding_ref(X, proj_mats)
    assert out_f32.shape == (batch, seq, OUT_FEAT)
    assert jnp.allclose(out_f32, ref_f32, atol=1e-4, rtol=1e-4)

    # --- bf16 streaming path (halved HBM read of X, f32 MXU accumulation) ---
    X_bf16 = X.astype(jnp.bfloat16)
    W_bf16 = jax.block_until_ready(_block_diag_weight_padded(proj_mats,
                                                             jnp.bfloat16))
    out_bf16 = jax.block_until_ready(embedding_forward(X_bf16, W_bf16))
    ref_bf16 = embedding_ref(
        X_bf16.astype(jnp.float32),
        [pm.astype(jnp.bfloat16).astype(jnp.float32) for pm in proj_mats])
    assert out_bf16.shape == (batch, seq, OUT_FEAT)
    assert jnp.allclose(out_bf16, ref_bf16, atol=1e-2, rtol=1e-2)

    print("KERNEL_OK")
</pallas_src>

<mosaic_0001>
module attributes {stable_mosaic.version = 11 : i64} {
  func.func @_proj_kernel(%arg0: i32, %arg1: memref<16x3536xf32, #tpu.memory_space<vmem>>, %arg2: memref<3536x128xf32, #tpu.memory_space<vmem>>, %arg3: memref<16x128xf32, #tpu.memory_space<vmem>>) attributes {dimension_semantics = [#tpu.dimension_semantics<parallel>], iteration_bounds = array<i64: 1>, scalar_prefetch = 0 : i64, scratch_operands = 0 : i64, tpu.core_type = #tpu.core_type<tc>, window_params = [{transform_indices = @transform_0, window_bounds = array<i64: 16, 3536>}, {pipeline_mode = #tpu.pipeline_mode<synchronous>, transform_indices = @transform_1, window_bounds = array<i64: 3536, 128>}, {transform_indices = @transform_2, window_bounds = array<i64: 16, 128>}]} {
    %c0 = arith.constant 0 : index
    %c0_0 = arith.constant 0 : index
    %0 = vector.load %arg1[%c0, %c0_0] : memref<16x3536xf32, #tpu.memory_space<vmem>>, vector<16x3536xf32>
    %c0_1 = arith.constant 0 : index
    %c0_2 = arith.constant 0 : index
    %1 = vector.load %arg2[%c0_1, %c0_2] : memref<3536x128xf32, #tpu.memory_space<vmem>>, vector<3536x128xf32>
    %cst = arith.constant dense<0.000000e+00> : vector<16x128xf32>
    %2 = tpu.matmul %0, %1, %cst {dimension_numbers = #tpu.dot_dimension_numbers<[1], [0], [0], [1], [0, 0, 1, 1], [], []>} : vector<16x3536xf32>, vector<3536x128xf32>, vector<16x128xf32> -> vector<16x128xf32>
    %c0_3 = arith.constant 0 : index
    %c0_4 = arith.constant 0 : index
    %3 = vector.load %arg3[%c0_3, %c0_4] : memref<16x128xf32, #tpu.memory_space<vmem>>, vector<16x128xf32>
    tpu.vector_store %arg3[%c0_3, %c0_4], %2 {strides = array<i32>} : memref<16x128xf32, #tpu.memory_space<vmem>>, vector<16x128xf32>,
    return
  }
  func.func @transform_0(%arg0: i32) -> (i32, i32) {
    %c0_i32 = arith.constant 0 : i32
    %c0_i32_0 = arith.constant 0 : i32
    return %arg0, %c0_i32 : i32, i32
  }
  func.func @transform_1(%arg0: i32) -> (i32, i32) {
    %c0_i32 = arith.constant 0 : i32
    %c0_i32_0 = arith.constant 0 : i32
    %c0_i32_1 = arith.constant 0 : i32
    return %c0_i32, %c0_i32_0 : i32, i32
  }
  func.func @transform_2(%arg0: i32) -> (i32, i32) {
    %c0_i32 = arith.constant 0 : i32
    %c0_i32_0 = arith.constant 0 : i32
    return %arg0, %c0_i32 : i32, i32
  }
}

</mosaic_0001>

<llo_original>
// kernel: _embedding_forward_impl.1
$region0: #{_embedding_forward_impl.1}
  #allocation0 [shape = 'u32[]', space=smem, size = 0x4, offset = 0x4, fixed_abs, tag = 'smem constant byte address 0x4 - core index']
  #allocation1 [shape = 'u32[72,128]{1,0:T(1,128)}', space=vmem, size = 0x9000, scoped, tag = 'internal scratch']
  %s0 = inlined_call_operand.hbm [shape: f32[16,3536], index: 0, kind: input, shape index: {}]
  %s1 = inlined_call_operand.hbm [shape: f32[3536,128], index: 1, kind: input, shape index: {}]
  %s2 = inlined_call_operand.vmem [shape: f32[16,128], index: 2, kind: output, shape index: {}]
  %s3 = sld [smem:[#allocation0]]
  $region26: #{_embedding_forward_impl.1} parent=0
    _
  %s5 = ssub.s32 1, %s3
  %s6 = scalar_select 0, %s5, %s3
  $region1: #{_embedding_forward_impl.1} parent=0
    #allocation2 [shape = 'u8[229376]{0}', space=vmem, size = 0x38000, scoped, tag = 'input window, operand 0, single buffered']
    #allocation3 [shape = 's32[1]{0}', space=sflag, size = 0x4, scoped, tag = 'scoped memory for _embedding_forward_impl.1']
    #allocation4 [shape = 'u8[1810432]{0}', space=vmem, size = 0x1ba000, scoped, tag = 'input window, operand 1, single buffered']
    #allocation5 [shape = 's32[1]{0}', space=sflag, size = 0x4, scoped, tag = 'scoped memory for _embedding_forward_impl.1']
    %7 = vsyncpa [#allocation3], 0
    %8 = vsyncpa [#allocation5], 0
    // Predicated region
    $region2: #{_embedding_forward_impl.1} parent=1 // pred_check
      _
    $region3: #{_embedding_forward_impl.1} parent=1 // pred_check_branch
      %10 = sbr.rel (0) target = $region5
    $region4: #{_embedding_forward_impl.1} parent=1 // pred_region
      %12 = vsyncadd [#allocation3], 0
      %s13 = sshll.u32 %s0, 4
      %s14 = int_to_ptr.hbm [resolvable:$true] %s13
      %s15 = sshll.u32 [#allocation2], 4
      %s16 = int_to_ptr.vmem [resolvable:$true] %s15
      %21 = dma.hbm_to_vmem [thread:$0]  %s14, 7168, %s16, [#allocation3], 3584, 3584, 224
    $region5: #{_embedding_forward_impl.1} parent=1 // pred_fallthru
      _
    // Predicated region
    $region6: #{_embedding_forward_impl.1} parent=1 // pred_check
      _
    $region7: #{_embedding_forward_impl.1} parent=1 // pred_check_branch
      %23 = sbr.rel (0) target = $region9
    $region8: #{_embedding_forward_impl.1} parent=1 // pred_region
      %25 = vsyncadd [#allocation5], 0
      %s26 = sshll.u32 %s1, 4
      %s27 = int_to_ptr.hbm [resolvable:$true] %s26
      %s28 = sshll.u32 [#allocation4], 4
      %s29 = int_to_ptr.vmem [resolvable:$true] %s28
      %34 = dma.hbm_to_vmem [thread:$0]  %s27, 56576, %s29, [#allocation5], 128, 128, 8
    $region9: #{_embedding_forward_impl.1} parent=1 // pred_fallthru
      _
    // Predicated region
    $region10: #{_embedding_forward_impl.1} parent=1 // pred_check
      _
    $region11: #{_embedding_forward_impl.1} parent=1 // pred_check_branch
      %36 = sbr.rel (0) target = $region13
    $region12: #{_embedding_forward_impl.1} parent=1 // pred_region
      %38 = dma.done [#allocation3], 7168
    $region13: #{_embedding_forward_impl.1} parent=1 // pred_fallthru
      _
    // Predicated region
    $region14: #{_embedding_forward_impl.1} parent=1 // pred_check
      _
    $region15: #{_embedding_forward_impl.1} parent=1 // pred_check_branch
      %40 = sbr.rel (0) target = $region17
    $region16: #{_embedding_forward_impl.1} parent=1 // pred_region
      %42 = dma.done [#allocation5], 56576
    $region17: #{_embedding_forward_impl.1} parent=1 // pred_fallthru
      _
    %v43 = vld [vmem:[#allocation2] sm:$0xff]
    %v44 = vld [vmem:[#allocation2 + $0x8] sm:$0xff]
    %v45 = vld [vmem:[#allocation2 + $0x10] sm:$0xff]
    %v46 = vld [vmem:[#allocation2 + $0x18] sm:$0xff]
    %v47 = vld [vmem:[#allocation2 + $0x20] sm:$0xff]
    %v48 = vld [vmem:[#allocation2 + $0x28] sm:$0xff]
    %v49 = vld [vmem:[#allocation2 + $0x30] sm:$0xff]
    %v50 = vld [vmem:[#allocation2 + $0x38] sm:$0xff]
    %v51 = vld [vmem:[#allocation2 + $0x40] sm:$0xff]
    %v52 = vld [vmem:[#allocation2 + $0x48] sm:$0xff]
    %v53 = vld [vmem:[#allocation2 + $0x50] sm:$0xff]
    %v54 = vld [vmem:[#allocation2 + $0x58] sm:$0xff]
    %v55 = vld [vmem:[#allocation2 + $0x60] sm:$0xff]
    %v56 = vld [vmem:[#allocation2 + $0x68] sm:$0xff]
    %v57 = vld [vmem:[#allocation2 + $0x70] sm:$0xff]
    %v58 = vld [vmem:[#allocation2 + $0x78] sm:$0xff]
    %v59 = vld [vmem:[#allocation2 + $0x80] sm:$0xff]
    %v60 = vld [vmem:[#allocation2 + $0x88] sm:$0xff]
    %v61 = vld [vmem:[#allocation2 + $0x90] sm:$0xff]
    %v62 = vld [vmem:[#allocation2 + $0x98] sm:$0xff]
    %v63 = vld [vmem:[#allocation2 + $0xa0] sm:$0xff]
    %v64 = vld [vmem:[#allocation2 + $0xa8] sm:$0xff]
    %v65 = vld [vmem:[#allocation2 + $0xb0] sm:$0xff]
    %v66 = vld [vmem:[#allocation2 + $0xb8] sm:$0xff]
    %v67 = vld [vmem:[#allocation2 + $0xc0] sm:$0xff]
    %v68 = vld [vmem:[#allocation2 + $0xc8] sm:$0xff]
    %v69 = vld [vmem:[#allocation2 + $0xd0] sm:$0xff]
    %v70 = vld [vmem:[#allocation2 + $0xd8] sm:$0xff]
    %v71 = vld [vmem:[#allocation2 + $0xe0] sm:$0xff]
    %v72 = vld [vmem:[#allocation2 + $0xe8] sm:$0xff]
    %v73 = vld [vmem:[#allocation2 + $0xf0] sm:$0xff]
    %v74 = vld [vmem:[#allocation2 + $0xf8] sm:$0xff]
    %v75 = vld [vmem:[#allocation2 + $0x100] sm:$0xff]
    %v76 = vld [vmem:[#allocation2 + $0x108] sm:$0xff]
    %v77 = vld [vmem:[#allocation2 + $0x110] sm:$0xff]
    %v78 = vld [vmem:[#allocation2 + $0x118] sm:$0xff]
    %v79 = vld [vmem:[#allocation2 + $0x120] sm:$0xff]
    %v80 = vld [vmem:[#allocation2 + $0x128] sm:$0xff]
    %v81 = vld [vmem:[#allocation2 + $0x130] sm:$0xff]
    %v82 = vld [vmem:[#allocation2 + $0x138] sm:$0xff]
    %v83 = vld [vmem:[#allocation2 + $0x140] sm:$0xff]
    %v84 = vld [vmem:[#allocation2 + $0x148] sm:$0xff]
    %v85 = vld [vmem:[#allocation2 + $0x150] sm:$0xff]
    %v86 = vld [vmem:[#allocation2 + $0x158] sm:$0xff]
    %v87 = vld [vmem:[#allocation2 + $0x160] sm:$0xff]
    %v88 = vld [vmem:[#allocation2 + $0x168] sm:$0xff]
    %v89 = vld [vmem:[#allocation2 + $0x170] sm:$0xff]
    %v90 = vld [vmem:[#allocation2 + $0x178] sm:$0xff]
    %v91 = vld [vmem:[#allocation2 + $0x180] sm:$0xff]
    %v92 = vld [vmem:[#allocation2 + $0x188] sm:$0xff]
    %v93 = vld [vmem:[#allocation2 + $0x190] sm:$0xff]
    %v94 = vld [vmem:[#allocation2 + $0x198] sm:$0xff]
    %v95 = vld [vmem:[#allocation2 + $0x1a0] sm:$0xff]
    %v96 = vld [vmem:[#allocation2 + $0x1a8] sm:$0xff]
    %v97 = vld [vmem:[#allocation2 + $0x1b0] sm:$0xff]
    %v98 = vld [vmem:[#allocation2 + $0x1b8] sm:$0xff]
    %v99 = vld [vmem:[#allocation4] sm:$0xff]
    %v100 = vld [vmem:[#allocation4 + $0x8] sm:$0xff]
    %v101 = vld [vmem:[#allocation4 + $0x10] sm:$0xff]
    %v102 = vld [vmem:[#allocation4 + $0x18] sm:$0xff]
    %v103 = vld [vmem:[#allocation4 + $0x20] sm:$0xff]
    %v104 = vld [vmem:[#allocation4 + $0x28] sm:$0xff]
    %v105 = vld [vmem:[#allocation4 + $0x30] sm:$0xff]
    %v106 = vld [vmem:[#allocation4 + $0x38] sm:$0xff]
    %v107 = vld [vmem:[#allocation4 + $0x40] sm:$0xff]
    %v108 = vld [vmem:[#allocation4 + $0x48] sm:$0xff]
    %v109 = vld [vmem:[#allocation4 + $0x50] sm:$0xff]
    %v110 = vld [vmem:[#allocation4 + $0x58] sm:$0xff]
    %v111 = vld [vmem:[#allocation4 + $0x60] sm:$0xff]
    %v112 = vld [vmem:[#allocation4 + $0x68] sm:$0xff]
    %v113 = vld [vmem:[#allocation4 + $0x70] sm:$0xff]
    %v114 = vld [vmem:[#allocation4 + $0x78] sm:$0xff]
    %v115 = vld [vmem:[#allocation4 + $0x80] sm:$0xff]
    %v116 = vld [vmem:[#allocation4 + $0x88] sm:$0xff]
    %v117 = vld [vmem:[#allocation4 + $0x90] sm:$0xff]
    %v118 = vld [vmem:[#allocation4 + $0x98] sm:$0xff]
    %v119 = vld [vmem:[#allocation4 + $0xa0] sm:$0xff]
    %v120 = vld [vmem:[#allocation4 + $0xa8] sm:$0xff]
    %v121 = vld [vmem:[#allocation4 + $0xb0] sm:$0xff]
    %v122 = vld [vmem:[#allocation4 + $0xb8] sm:$0xff]
    %v123 = vld [vmem:[#allocation4 + $0xc0] sm:$0xff]
    %v124 = vld [vmem:[#allocation4 + $0xc8] sm:$0xff]
    %v125 = vld [vmem:[#allocation4 + $0xd0] sm:$0xff]
    %v126 = vld [vmem:[#allocation4 + $0xd8] sm:$0xff]
    %v127 = vld [vmem:[#allocation4 + $0xe0] sm:$0xff]
    %v128 = vld [vmem:[#allocation4 + $0xe8] sm:$0xff]
    %v129 = vld [vmem:[#allocation4 + $0xf0] sm:$0xff]
    %v130 = vld [vmem:[#allocation4 + $0xf8] sm:$0xff]
    %v131 = vld [vmem:[#allocation4 + $0x100] sm:$0xff]
    %v132 = vld [vmem:[#allocation4 + $0x108] sm:$0xff]
    %v133 = vld [vmem:[#allocation4 + $0x110] sm:$0xff]
    %v134 = vld [vmem:[#allocation4 + $0x118] sm:$0xff]
    %v135 = vld [vmem:[#allocation4 + $0x120] sm:$0xff]
    %v136 = vld [vmem:[#allocation4 + $0x128] sm:$0xff]
    %v137 = vld [vmem:[#allocation4 + $0x130] sm:$0xff]
    %v138 = vld [vmem:[#allocation4 + $0x138] sm:$0xff]
    %v139 = vld [vmem:[#allocation4 + $0x140] sm:$0xff]
    %v140 = vld [vmem:[#allocation4 + $0x148] sm:$0xff]
    %v141 = vld [vmem:[#allocation4 + $0x150] sm:$0xff]
    %v142 = vld [vmem:[#allocation4 + $0x158] sm:$0xff]
    %v143 = vld [vmem:[#allocation4 + $0x160] sm:$0xff]
    %v144 = vld [vmem:[#allocation4 + $0x168] sm:$0xff]
    %v145 = vld [vmem:[#allocation4 + $0x170] sm:$0xff]
    %v146 = vld [vmem:[#allocation4 + $0x178] sm:$0xff]
    %v147 = vld [vmem:[#allocation4 + $0x180] sm:$0xff]
    %v148 = vld [vmem:[#allocation4 + $0x188] sm:$0xff]
    %v149 = vld [vmem:[#allocation4 + $0x190] sm:$0xff]
    %v150 = vld [vmem:[#allocation4 + $0x198] sm:$0xff]
    %v151 = vld [vmem:[#allocation4 + $0x1a0] sm:$0xff]
    %v152 = vld [vmem:[#allocation4 + $0x1a8] sm:$0xff]
    %v153 = vld [vmem:[#allocation4 + $0x1b0] sm:$0xff]
    %v154 = vld [vmem:[#allocation4 + $0x1b8] sm:$0xff]
    %v155 = vld [vmem:[#allocation4 + $0x1c0] sm:$0xff]
    %v156 = vld [vmem:[#allocation4 + $0x1c8] sm:$0xff]
    %v157 = vld [vmem:[#allocation4 + $0x1d0] sm:$0xff]
    %v158 = vld [vmem:[#allocation4 + $0x1d8] sm:$0xff]
    %v159 = vld [vmem:[#allocation4 + $0x1e0] sm:$0xff]
    %v160 = vld [vmem:[#allocation4 + $0x1e8] sm:$0xff]
    %v161 = vld [vmem:[#allocation4 + $0x1f0] sm:$0xff]
    %v162 = vld [vmem:[#allocation4 + $0x1f8] sm:$0xff]
    %v163 = vld [vmem:[#allocation4 + $0x200] sm:$0xff]
    %v164 = vld [vmem:[#allocation4 + $0x208] sm:$0xff]
    %v165 = vld [vmem:[#allocation4 + $0x210] sm:$0xff]
    %v166 = vld [vmem:[#allocation4 + $0x218] sm:$0xff]
    %v167 = vld [vmem:[#allocation4 + $0x220] sm:$0xff]
    %v168 = vld [vmem:[#allocation4 + $0x228] sm:$0xff]
    %v169 = vld [vmem:[#allocation4 + $0x230] sm:$0xff]
    %v170 = vld [vmem:[#allocation4 + $0x238] sm:$0xff]
    %v171 = vld [vmem:[#allocation4 + $0x240] sm:$0xff]
    %v172 = vld [vmem:[#allocation4 + $0x248] sm:$0xff]
    %v173 = vld [vmem:[#allocation4 + $0x250] sm:$0xff]
    %v174 = vld [vmem:[#allocation4 + $0x258] sm:$0xff]
    %v175 = vld [vmem:[#allocation4 + $0x260] sm:$0xff]
    %v176 = vld [vmem:[#allocation4 + $0x268] sm:$0xff]
    %v177 = vld [vmem:[#allocation4 + $0x270] sm:$0xff]
    %v178 = vld [vmem:[#allocation4 + $0x278] sm:$0xff]
    %v179 = vld [vmem:[#allocation4 + $0x280] sm:$0xff]
    %v180 = vld [vmem:[#allocation4 + $0x288] sm:$0xff]
    %v181 = vld [vmem:[#allocation4 + $0x290] sm:$0xff]
    %v182 = vld [vmem:[#allocation4 + $0x298] sm:$0xff]
    %v183 = vld [vmem:[#allocation4 + $0x2a0] sm:$0xff]
    %v184 = vld [vmem:[#allocation4 + $0x2a8] sm:$0xff]
    %v185 = vld [vmem:[#allocation4 + $0x2b0] sm:$0xff]
    %v186 = vld [vmem:[#allocation4 + $0x2b8] sm:$0xff]
    %v187 = vld [vmem:[#allocation4 + $0x2c0] sm:$0xff]
    %v188 = vld [vmem:[#allocation4 + $0x2c8] sm:$0xff]
    %v189 = vld [vmem:[#allocation4 + $0x2d0] sm:$0xff]
    %v190 = vld [vmem:[#allocation4 + $0x2d8] sm:$0xff]
    %v191 = vld [vmem:[#allocation4 + $0x2e0] sm:$0xff]
    %v192 = vld [vmem:[#allocation4 + $0x2e8] sm:$0xff]
    %v193 = vld [vmem:[#allocation4 + $0x2f0] sm:$0xff]
    %v194 = vld [vmem:[#allocation4 + $0x2f8] sm:$0xff]
    %v195 = vld [vmem:[#allocation4 + $0x300] sm:$0xff]
    %v196 = vld [vmem:[#allocation4 + $0x308] sm:$0xff]
    %v197 = vld [vmem:[#allocation4 + $0x310] sm:$0xff]
    %v198 = vld [vmem:[#allocation4 + $0x318] sm:$0xff]
    %v199 = vld [vmem:[#allocation4 + $0x320] sm:$0xff]
    %v200 = vld [vmem:[#allocation4 + $0x328] sm:$0xff]
    %v201 = vld [vmem:[#allocation4 + $0x330] sm:$0xff]
    %v202 = vld [vmem:[#allocation4 + $0x338] sm:$0xff]
    %v203 = vld [vmem:[#allocation4 + $0x340] sm:$0xff]
    %v204 = vld [vmem:[#allocation4 + $0x348] sm:$0xff]
    %v205 = vld [vmem:[#allocation4 + $0x350] sm:$0xff]
    %v206 = vld [vmem:[#allocation4 + $0x358] sm:$0xff]
    %v207 = vld [vmem:[#allocation4 + $0x360] sm:$0xff]
    %v208 = vld [vmem:[#allocation4 + $0x368] sm:$0xff]
    %v209 = vld [vmem:[#allocation4 + $0x370] sm:$0xff]
    %v210 = vld [vmem:[#allocation4 + $0x378] sm:$0xff]
    %v211 = vld [vmem:[#allocation4 + $0x380] sm:$0xff]
    %v212 = vld [vmem:[#allocation4 + $0x388] sm:$0xff]
    %v213 = vld [vmem:[#allocation4 + $0x390] sm:$0xff]
    %v214 = vld [vmem:[#allocation4 + $0x398] sm:$0xff]
    %v215 = vld [vmem:[#allocation4 + $0x3a0] sm:$0xff]
    %v216 = vld [vmem:[#allocation4 + $0x3a8] sm:$0xff]
    %v217 = vld [vmem:[#allocation4 + $0x3b0] sm:$0xff]
    %v218 = vld [vmem:[#allocation4 + $0x3b8] sm:$0xff]
    %v219 = vld [vmem:[#allocation4 + $0x3c0] sm:$0xff]
    %v220 = vld [vmem:[#allocation4 + $0x3c8] sm:$0xff]
    %v221 = vld [vmem:[#allocation4 + $0x3d0] sm:$0xff]
    %v222 = vld [vmem:[#allocation4 + $0x3d8] sm:$0xff]
    %v223 = vld [vmem:[#allocation4 + $0x3e0] sm:$0xff]
    %v224 = vld [vmem:[#allocation4 + $0x3e8] sm:$0xff]
    %v225 = vld [vmem:[#allocation4 + $0x3f0] sm:$0xff]
    %v226 = vld [vmem:[#allocation4 + $0x3f8] sm:$0xff]
    %v227 = vld [vmem:[#allocation4 + $0x400] sm:$0xff]
    %v228 = vld [vmem:[#allocation4 + $0x408] sm:$0xff]
    %v229 = vld [vmem:[#allocation4 + $0x410] sm:$0xff]
    %v230 = vld [vmem:[#allocation4 + $0x418] sm:$0xff]
    %v231 = vld [vmem:[#allocation4 + $0x420] sm:$0xff]
    %v232 = vld [vmem:[#allocation4 + $0x428] sm:$0xff]
    %v233 = vld [vmem:[#allocation4 + $0x430] sm:$0xff]
    %v234 = vld [vmem:[#allocation4 + $0x438] sm:$0xff]
    %v235 = vld [vmem:[#allocation4 + $0x440] sm:$0xff]
    %v236 = vld [vmem:[#allocation4 + $0x448] sm:$0xff]
    %v237 = vld [vmem:[#allocation4 + $0x450] sm:$0xff]
    %v238 = vld [vmem:[#allocation4 + $0x458] sm:$0xff]
    %v239 = vld [vmem:[#allocation4 + $0x460] sm:$0xff]
    %v240 = vld [vmem:[#allocation4 + $0x468] sm:$0xff]
    %v241 = vld [vmem:[#allocation4 + $0x470] sm:$0xff]
    %v242 = vld [vmem:[#allocation4 + $0x478] sm:$0xff]
    %v243 = vld [vmem:[#allocation4 + $0x480] sm:$0xff]
    %v244 = vld [vmem:[#allocation4 + $0x488] sm:$0xff]
    %v245 = vld [vmem:[#allocation4 + $0x490] sm:$0xff]
    %v246 = vld [vmem:[#allocation4 + $0x498] sm:$0xff]
    %v247 = vld [vmem:[#allocation4 + $0x4a0] sm:$0xff]
    %v248 = vld [vmem:[#allocation4 + $0x4a8] sm:$0xff]
    %v249 = vld [vmem:[#allocation4 + $0x4b0] sm:$0xff]
    %v250 = vld [vmem:[#allocation4 + $0x4b8] sm:$0xff]
    %v251 = vld [vmem:[#allocation4 + $0x4c0] sm:$0xff]
    %v252 = vld [vmem:[#allocation4 + $0x4c8] sm:$0xff]
    %v253 = vld [vmem:[#allocation4 + $0x4d0] sm:$0xff]
    %v254 = vld [vmem:[#allocation4 + $0x4d8] sm:$0xff]
    %v255 = vld [vmem:[#allocation4 + $0x4e0] sm:$0xff]
    %v256 = vld [vmem:[#allocation4 + $0x4e8] sm:$0xff]
    %v257 = vld [vmem:[#allocation4 + $0x4f0] sm:$0xff]
    %v258 = vld [vmem:[#allocation4 + $0x4f8] sm:$0xff]
    %v259 = vld [vmem:[#allocation4 + $0x500] sm:$0xff]
    %v260 = vld [vmem:[#allocation4 + $0x508] sm:$0xff]
    %v261 = vld [vmem:[#allocation4 + $0x510] sm:$0xff]
    %v262 = vld [vmem:[#allocation4 + $0x518] sm:$0xff]
    %v263 = vld [vmem:[#allocation4 + $0x520] sm:$0xff]
    %v264 = vld [vmem:[#allocation4 + $0x528] sm:$0xff]
    %v265 = vld [vmem:[#allocation4 + $0x530] sm:$0xff]
    %v266 = vld [vmem:[#allocation4 + $0x538] sm:$0xff]
    %v267 = vld [vmem:[#allocation4 + $0x540] sm:$0xff]
    %v268 = vld [vmem:[#allocation4 + $0x548] sm:$0xff]
    %v269 = vld [vmem:[#allocation4 + $0x550] sm:$0xff]
    %v270 = vld [vmem:[#allocation4 + $0x558] sm:$0xff]
    %v271 = vld [vmem:[#allocation4 + $0x560] sm:$0xff]
    %v272 = vld [vmem:[#allocation4 + $0x568] sm:$0xff]
    %v273 = vld [vmem:[#allocation4 + $0x570] sm:$0xff]
    %v274 = vld [vmem:[#allocation4 + $0x578] sm:$0xff]
    %v275 = vld [vmem:[#allocation4 + $0x580] sm:$0xff]
    %v276 = vld [vmem:[#allocation4 + $0x588] sm:$0xff]
    %v277 = vld [vmem:[#allocation4 + $0x590] sm:$0xff]
    %v278 = vld [vmem:[#allocation4 + $0x598] sm:$0xff]
    %v279 = vld [vmem:[#allocation4 + $0x5a0] sm:$0xff]
    %v280 = vld [vmem:[#allocation4 + $0x5a8] sm:$0xff]
    %v281 = vld [vmem:[#allocation4 + $0x5b0] sm:$0xff]
    %v282 = vld [vmem:[#allocation4 + $0x5b8] sm:$0xff]
    %v283 = vld [vmem:[#allocation4 + $0x5c0] sm:$0xff]
    %v284 = vld [vmem:[#allocation4 + $0x5c8] sm:$0xff]
    %v285 = vld [vmem:[#allocation4 + $0x5d0] sm:$0xff]
    %v286 = vld [vmem:[#allocation4 + $0x5d8] sm:$0xff]
    %v287 = vld [vmem:[#allocation4 + $0x5e0] sm:$0xff]
    %v288 = vld [vmem:[#allocation4 + $0x5e8] sm:$0xff]
    %v289 = vld [vmem:[#allocation4 + $0x5f0] sm:$0xff]
    %v290 = vld [vmem:[#allocation4 + $0x5f8] sm:$0xff]
    %v291 = vld [vmem:[#allocation4 + $0x600] sm:$0xff]
    %v292 = vld [vmem:[#allocation4 + $0x608] sm:$0xff]
    %v293 = vld [vmem:[#allocation4 + $0x610] sm:$0xff]
    %v294 = vld [vmem:[#allocation4 + $0x618] sm:$0xff]
    %v295 = vld [vmem:[#allocation4 + $0x620] sm:$0xff]
    %v296 = vld [vmem:[#allocation4 + $0x628] sm:$0xff]
    %v297 = vld [vmem:[#allocation4 + $0x630] sm:$0xff]
    %v298 = vld [vmem:[#allocation4 + $0x638] sm:$0xff]
    %v299 = vld [vmem:[#allocation4 + $0x640] sm:$0xff]
    %v300 = vld [vmem:[#allocation4 + $0x648] sm:$0xff]
    %v301 = vld [vmem:[#allocation4 + $0x650] sm:$0xff]
    %v302 = vld [vmem:[#allocation4 + $0x658] sm:$0xff]
    %v303 = vld [vmem:[#allocation4 + $0x660] sm:$0xff]
    %v304 = vld [vmem:[#allocation4 + $0x668] sm:$0xff]
    %v305 = vld [vmem:[#allocation4 + $0x670] sm:$0xff]
    %v306 = vld [vmem:[#allocation4 + $0x678] sm:$0xff]
    %v307 = vld [vmem:[#allocation4 + $0x680] sm:$0xff]
    %v308 = vld [vmem:[#allocation4 + $0x688] sm:$0xff]
    %v309 = vld [vmem:[#allocation4 + $0x690] sm:$0xff]
    %v310 = vld [vmem:[#allocation4 + $0x698] sm:$0xff]
    %v311 = vld [vmem:[#allocation4 + $0x6a0] sm:$0xff]
    %v312 = vld [vmem:[#allocation4 + $0x6a8] sm:$0xff]
    %v313 = vld [vmem:[#allocation4 + $0x6b0] sm:$0xff]
    %v314 = vld [vmem:[#allocation4 + $0x6b8] sm:$0xff]
    %v315 = vld [vmem:[#allocation4 + $0x6c0] sm:$0xff]
    %v316 = vld [vmem:[#allocation4 + $0x6c8] sm:$0xff]
    %v317 = vld [vmem:[#allocation4 + $0x6d0] sm:$0xff]
    %v318 = vld [vmem:[#allocation4 + $0x6d8] sm:$0xff]
    %v319 = vld [vmem:[#allocation4 + $0x6e0] sm:$0xff]
    %v320 = vld [vmem:[#allocation4 + $0x6e8] sm:$0xff]
    %v321 = vld [vmem:[#allocation4 + $0x6f0] sm:$0xff]
    %v322 = vld [vmem:[#allocation4 + $0x6f8] sm:$0xff]
    %v323 = vld [vmem:[#allocation4 + $0x700] sm:$0xff]
    %v324 = vld [vmem:[#allocation4 + $0x708] sm:$0xff]
    %v325 = vld [vmem:[#allocation4 + $0x710] sm:$0xff]
    %v326 = vld [vmem:[#allocation4 + $0x718] sm:$0xff]
    %v327 = vld [vmem:[#allocation4 + $0x720] sm:$0xff]
    %v328 = vld [vmem:[#allocation4 + $0x728] sm:$0xff]
    %v329 = vld [vmem:[#allocation4 + $0x730] sm:$0xff]
    %v330 = vld [vmem:[#allocation4 + $0x738] sm:$0xff]
    %v331 = vld [vmem:[#allocation4 + $0x740] sm:$0xff]
    %v332 = vld [vmem:[#allocation4 + $0x748] sm:$0xff]
    %v333 = vld [vmem:[#allocation4 + $0x750] sm:$0xff]
    %v334 = vld [vmem:[#allocation4 + $0x758] sm:$0xff]
    %v335 = vld [vmem:[#allocation4 + $0x760] sm:$0xff]
    %v336 = vld [vmem:[#allocation4 + $0x768] sm:$0xff]
    %v337 = vld [vmem:[#allocation4 + $0x770] sm:$0xff]
    %v338 = vld [vmem:[#allocation4 + $0x778] sm:$0xff]
    %v339 = vld [vmem:[#allocation4 + $0x780] sm:$0xff]
    %v340 = vld [vmem:[#allocation4 + $0x788] sm:$0xff]
    %v341 = vld [vmem:[#allocation4 + $0x790] sm:$0xff]
    %v342 = vld [vmem:[#allocation4 + $0x798] sm:$0xff]
    %v343 = vld [vmem:[#allocation4 + $0x7a0] sm:$0xff]
    %v344 = vld [vmem:[#allocation4 + $0x7a8] sm:$0xff]
    %v345 = vld [vmem:[#allocation4 + $0x7b0] sm:$0xff]
    %v346 = vld [vmem:[#allocation4 + $0x7b8] sm:$0xff]
    %v347 = vld [vmem:[#allocation4 + $0x7c0] sm:$0xff]
    %v348 = vld [vmem:[#allocation4 + $0x7c8] sm:$0xff]
    %v349 = vld [vmem:[#allocation4 + $0x7d0] sm:$0xff]
    %v350 = vld [vmem:[#allocation4 + $0x7d8] sm:$0xff]
    %v351 = vld [vmem:[#allocation4 + $0x7e0] sm:$0xff]
    %v352 = vld [vmem:[#allocation4 + $0x7e8] sm:$0xff]
    %v353 = vld [vmem:[#allocation4 + $0x7f0] sm:$0xff]
    %v354 = vld [vmem:[#allocation4 + $0x7f8] sm:$0xff]
    %v355 = vld [vmem:[#allocation4 + $0x800] sm:$0xff]
    %v356 = vld [vmem:[#allocation4 + $0x808] sm:$0xff]
    %v357 = vld [vmem:[#allocation4 + $0x810] sm:$0xff]
    %v358 = vld [vmem:[#allocation4 + $0x818] sm:$0xff]
    %v359 = vld [vmem:[#allocation4 + $0x820] sm:$0xff]
    %v360 = vld [vmem:[#allocation4 + $0x828] sm:$0xff]
    %v361 = vld [vmem:[#allocation4 + $0x830] sm:$0xff]
    %v362 = vld [vmem:[#allocation4 + $0x838] sm:$0xff]
    %v363 = vld [vmem:[#allocation4 + $0x840] sm:$0xff]
    %v364 = vld [vmem:[#allocation4 + $0x848] sm:$0xff]
    %v365 = vld [vmem:[#allocation4 + $0x850] sm:$0xff]
    %v366 = vld [vmem:[#allocation4 + $0x858] sm:$0xff]
    %v367 = vld [vmem:[#allocation4 + $0x860] sm:$0xff]
    %v368 = vld [vmem:[#allocation4 + $0x868] sm:$0xff]
    %v369 = vld [vmem:[#allocation4 + $0x870] sm:$0xff]
    %v370 = vld [vmem:[#allocation4 + $0x878] sm:$0xff]
    %v371 = vld [vmem:[#allocation4 + $0x880] sm:$0xff]
    %v372 = vld [vmem:[#allocation4 + $0x888] sm:$0xff]
    %v373 = vld [vmem:[#allocation4 + $0x890] sm:$0xff]
    %v374 = vld [vmem:[#allocation4 + $0x898] sm:$0xff]
    %v375 = vld [vmem:[#allocation4 + $0x8a0] sm:$0xff]
    %v376 = vld [vmem:[#allocation4 + $0x8a8] sm:$0xff]
    %v377 = vld [vmem:[#allocation4 + $0x8b0] sm:$0xff]
    %v378 = vld [vmem:[#allocation4 + $0x8b8] sm:$0xff]
    %v379 = vld [vmem:[#allocation4 + $0x8c0] sm:$0xff]
    %v380 = vld [vmem:[#allocation4 + $0x8c8] sm:$0xff]
    %v381 = vld [vmem:[#allocation4 + $0x8d0] sm:$0xff]
    %v382 = vld [vmem:[#allocation4 + $0x8d8] sm:$0xff]
    %v383 = vld [vmem:[#allocation4 + $0x8e0] sm:$0xff]
    %v384 = vld [vmem:[#allocation4 + $0x8e8] sm:$0xff]
    %v385 = vld [vmem:[#allocation4 + $0x8f0] sm:$0xff]
    %v386 = vld [vmem:[#allocation4 + $0x8f8] sm:$0xff]
    %v387 = vld [vmem:[#allocation4 + $0x900] sm:$0xff]
    %v388 = vld [vmem:[#allocation4 + $0x908] sm:$0xff]
    %v389 = vld [vmem:[#allocation4 + $0x910] sm:$0xff]
    %v390 = vld [vmem:[#allocation4 + $0x918] sm:$0xff]
    %v391 = vld [vmem:[#allocation4 + $0x920] sm:$0xff]
    %v392 = vld [vmem:[#allocation4 + $0x928] sm:$0xff]
    %v393 = vld [vmem:[#allocation4 + $0x930] sm:$0xff]
    %v394 = vld [vmem:[#allocation4 + $0x938] sm:$0xff]
    %v395 = vld [vmem:[#allocation4 + $0x940] sm:$0xff]
    %v396 = vld [vmem:[#allocation4 + $0x948] sm:$0xff]
    %v397 = vld [vmem:[#allocation4 + $0x950] sm:$0xff]
    %v398 = vld [vmem:[#allocation4 + $0x958] sm:$0xff]
    %v399 = vld [vmem:[#allocation4 + $0x960] sm:$0xff]
    %v400 = vld [vmem:[#allocation4 + $0x968] sm:$0xff]
    %v401 = vld [vmem:[#allocation4 + $0x970] sm:$0xff]
    %v402 = vld [vmem:[#allocation4 + $0x978] sm:$0xff]
    %v403 = vld [vmem:[#allocation4 + $0x980] sm:$0xff]
    %v404 = vld [vmem:[#allocation4 + $0x988] sm:$0xff]
    %v405 = vld [vmem:[#allocation4 + $0x990] sm:$0xff]
    %v406 = vld [vmem:[#allocation4 + $0x998] sm:$0xff]
    %v407 = vld [vmem:[#allocation4 + $0x9a0] sm:$0xff]
    %v408 = vld [vmem:[#allocation4 + $0x9a8] sm:$0xff]
    %v409 = vld [vmem:[#allocation4 + $0x9b0] sm:$0xff]
    %v410 = vld [vmem:[#allocation4 + $0x9b8] sm:$0xff]
    %v411 = vld [vmem:[#allocation4 + $0x9c0] sm:$0xff]
    %v412 = vld [vmem:[#allocation4 + $0x9c8] sm:$0xff]
    %v413 = vld [vmem:[#allocation4 + $0x9d0] sm:$0xff]
    %v414 = vld [vmem:[#allocation4 + $0x9d8] sm:$0xff]
    %v415 = vld [vmem:[#allocation4 + $0x9e0] sm:$0xff]
    %v416 = vld [vmem:[#allocation4 + $0x9e8] sm:$0xff]
    %v417 = vld [vmem:[#allocation4 + $0x9f0] sm:$0xff]
    %v418 = vld [vmem:[#allocation4 + $0x9f8] sm:$0xff]
    %v419 = vld [vmem:[#allocation4 + $0xa00] sm:$0xff]
    %v420 = vld [vmem:[#allocation4 + $0xa08] sm:$0xff]
    %v421 = vld [vmem:[#allocation4 + $0xa10] sm:$0xff]
    %v422 = vld [vmem:[#allocation4 + $0xa18] sm:$0xff]
    %v423 = vld [vmem:[#allocation4 + $0xa20] sm:$0xff]
    %v424 = vld [vmem:[#allocation4 + $0xa28] sm:$0xff]
    %v425 = vld [vmem:[#allocation4 + $0xa30] sm:$0xff]
    %v426 = vld [vmem:[#allocation4 + $0xa38] sm:$0xff]
    %v427 = vld [vmem:[#allocation4 + $0xa40] sm:$0xff]
    %v428 = vld [vmem:[#allocation4 + $0xa48] sm:$0xff]
    %v429 = vld [vmem:[#allocation4 + $0xa50] sm:$0xff]
    %v430 = vld [vmem:[#allocation4 + $0xa58] sm:$0xff]
    %v431 = vld [vmem:[#allocation4 + $0xa60] sm:$0xff]
    %v432 = vld [vmem:[#allocation4 + $0xa68] sm:$0xff]
    %v433 = vld [vmem:[#allocation4 + $0xa70] sm:$0xff]
    %v434 = vld [vmem:[#allocation4 + $0xa78] sm:$0xff]
    %v435 = vld [vmem:[#allocation4 + $0xa80] sm:$0xff]
    %v436 = vld [vmem:[#allocation4 + $0xa88] sm:$0xff]
    %v437 = vld [vmem:[#allocation4 + $0xa90] sm:$0xff]
    %v438 = vld [vmem:[#allocation4 + $0xa98] sm:$0xff]
    %v439 = vld [vmem:[#allocation4 + $0xaa0] sm:$0xff]
    %v440 = vld [vmem:[#allocation4 + $0xaa8] sm:$0xff]
    %v441 = vld [vmem:[#allocation4 + $0xab0] sm:$0xff]
    %v442 = vld [vmem:[#allocation4 + $0xab8] sm:$0xff]
    %v443 = vld [vmem:[#allocation4 + $0xac0] sm:$0xff]
    %v444 = vld [vmem:[#allocation4 + $0xac8] sm:$0xff]
    %v445 = vld [vmem:[#allocation4 + $0xad0] sm:$0xff]
    %v446 = vld [vmem:[#allocation4 + $0xad8] sm:$0xff]
    %v447 = vld [vmem:[#allocation4 + $0xae0] sm:$0xff]
    %v448 = vld [vmem:[#allocation4 + $0xae8] sm:$0xff]
    %v449 = vld [vmem:[#allocation4 + $0xaf0] sm:$0xff]
    %v450 = vld [vmem:[#allocation4 + $0xaf8] sm:$0xff]
    %v451 = vld [vmem:[#allocation4 + $0xb00] sm:$0xff]
    %v452 = vld [vmem:[#allocation4 + $0xb08] sm:$0xff]
    %v453 = vld [vmem:[#allocation4 + $0xb10] sm:$0xff]
    %v454 = vld [vmem:[#allocation4 + $0xb18] sm:$0xff]
    %v455 = vld [vmem:[#allocation4 + $0xb20] sm:$0xff]
    %v456 = vld [vmem:[#allocation4 + $0xb28] sm:$0xff]
    %v457 = vld [vmem:[#allocation4 + $0xb30] sm:$0xff]
    %v458 = vld [vmem:[#allocation4 + $0xb38] sm:$0xff]
    %v459 = vld [vmem:[#allocation4 + $0xb40] sm:$0xff]
    %v460 = vld [vmem:[#allocation4 + $0xb48] sm:$0xff]
    %v461 = vld [vmem:[#allocation4 + $0xb50] sm:$0xff]
    %v462 = vld [vmem:[#allocation4 + $0xb58] sm:$0xff]
    %v463 = vld [vmem:[#allocation4 + $0xb60] sm:$0xff]
    %v464 = vld [vmem:[#allocation4 + $0xb68] sm:$0xff]
    %v465 = vld [vmem:[#allocation4 + $0xb70] sm:$0xff]
    %v466 = vld [vmem:[#allocation4 + $0xb78] sm:$0xff]
    %v467 = vld [vmem:[#allocation4 + $0xb80] sm:$0xff]
    %v468 = vld [vmem:[#allocation4 + $0xb88] sm:$0xff]
    %v469 = vld [vmem:[#allocation4 + $0xb90] sm:$0xff]
    %v470 = vld [vmem:[#allocation4 + $0xb98] sm:$0xff]
    %v471 = vld [vmem:[#allocation4 + $0xba0] sm:$0xff]
    %v472 = vld [vmem:[#allocation4 + $0xba8] sm:$0xff]
    %v473 = vld [vmem:[#allocation4 + $0xbb0] sm:$0xff]
    %v474 = vld [vmem:[#allocation4 + $0xbb8] sm:$0xff]
    %v475 = vld [vmem:[#allocation4 + $0xbc0] sm:$0xff]
    %v476 = vld [vmem:[#allocation4 + $0xbc8] sm:$0xff]
    %v477 = vld [vmem:[#allocation4 + $0xbd0] sm:$0xff]
    %v478 = vld [vmem:[#allocation4 + $0xbd8] sm:$0xff]
    %v479 = vld [vmem:[#allocation4 + $0xbe0] sm:$0xff]
    %v480 = vld [vmem:[#allocation4 + $0xbe8] sm:$0xff]
    %v481 = vld [vmem:[#allocation4 + $0xbf0] sm:$0xff]
    %v482 = vld [vmem:[#allocation4 + $0xbf8] sm:$0xff]
    %v483 = vld [vmem:[#allocation4 + $0xc00] sm:$0xff]
    %v484 = vld [vmem:[#allocation4 + $0xc08] sm:$0xff]
    %v485 = vld [vmem:[#allocation4 + $0xc10] sm:$0xff]
    %v486 = vld [vmem:[#allocation4 + $0xc18] sm:$0xff]
    %v487 = vld [vmem:[#allocation4 + $0xc20] sm:$0xff]
    %v488 = vld [vmem:[#allocation4 + $0xc28] sm:$0xff]
    %v489 = vld [vmem:[#allocation4 + $0xc30] sm:$0xff]
    %v490 = vld [vmem:[#allocation4 + $0xc38] sm:$0xff]
    %v491 = vld [vmem:[#allocation4 + $0xc40] sm:$0xff]
    %v492 = vld [vmem:[#allocation4 + $0xc48] sm:$0xff]
    %v493 = vld [vmem:[#allocation4 + $0xc50] sm:$0xff]
    %v494 = vld [vmem:[#allocation4 + $0xc58] sm:$0xff]
    %v495 = vld [vmem:[#allocation4 + $0xc60] sm:$0xff]
    %v496 = vld [vmem:[#allocation4 + $0xc68] sm:$0xff]
    %v497 = vld [vmem:[#allocation4 + $0xc70] sm:$0xff]
    %v498 = vld [vmem:[#allocation4 + $0xc78] sm:$0xff]
    %v499 = vld [vmem:[#allocation4 + $0xc80] sm:$0xff]
    %v500 = vld [vmem:[#allocation4 + $0xc88] sm:$0xff]
    %v501 = vld [vmem:[#allocation4 + $0xc90] sm:$0xff]
    %v502 = vld [vmem:[#allocation4 + $0xc98] sm:$0xff]
    %v503 = vld [vmem:[#allocation4 + $0xca0] sm:$0xff]
    %v504 = vld [vmem:[#allocation4 + $0xca8] sm:$0xff]
    %v505 = vld [vmem:[#allocation4 + $0xcb0] sm:$0xff]
    %v506 = vld [vmem:[#allocation4 + $0xcb8] sm:$0xff]
    %v507 = vld [vmem:[#allocation4 + $0xcc0] sm:$0xff]
    %v508 = vld [vmem:[#allocation4 + $0xcc8] sm:$0xff]
    %v509 = vld [vmem:[#allocation4 + $0xcd0] sm:$0xff]
    %v510 = vld [vmem:[#allocation4 + $0xcd8] sm:$0xff]
    %v511 = vld [vmem:[#allocation4 + $0xce0] sm:$0xff]
    %v512 = vld [vmem:[#allocation4 + $0xce8] sm:$0xff]
    %v513 = vld [vmem:[#allocation4 + $0xcf0] sm:$0xff]
    %v514 = vld [vmem:[#allocation4 + $0xcf8] sm:$0xff]
    %v515 = vld [vmem:[#allocation4 + $0xd00] sm:$0xff]
    %v516 = vld [vmem:[#allocation4 + $0xd08] sm:$0xff]
    %v517 = vld [vmem:[#allocation4 + $0xd10] sm:$0xff]
    %v518 = vld [vmem:[#allocation4 + $0xd18] sm:$0xff]
    %v519 = vld [vmem:[#allocation4 + $0xd20] sm:$0xff]
    %v520 = vld [vmem:[#allocation4 + $0xd28] sm:$0xff]
    %v521 = vld [vmem:[#allocation4 + $0xd30] sm:$0xff]
    %v522 = vld [vmem:[#allocation4 + $0xd38] sm:$0xff]
    %v523 = vld [vmem:[#allocation4 + $0xd40] sm:$0xff]
    %v524 = vld [vmem:[#allocation4 + $0xd48] sm:$0xff]
    %v525 = vld [vmem:[#allocation4 + $0xd50] sm:$0xff]
    %v526 = vld [vmem:[#allocation4 + $0xd58] sm:$0xff]
    %v527 = vld [vmem:[#allocation4 + $0xd60] sm:$0xff]
    %v528 = vld [vmem:[#allocation4 + $0xd68] sm:$0xff]
    %v529 = vld [vmem:[#allocation4 + $0xd70] sm:$0xff]
    %v530 = vld [vmem:[#allocation4 + $0xd78] sm:$0xff]
    %v531 = vld [vmem:[#allocation4 + $0xd80] sm:$0xff]
    %v532 = vld [vmem:[#allocation4 + $0xd88] sm:$0xff]
    %v533 = vld [vmem:[#allocation4 + $0xd90] sm:$0xff]
    %v534 = vld [vmem:[#allocation4 + $0xd98] sm:$0xff]
    %v535 = vld [vmem:[#allocation4 + $0xda0] sm:$0xff]
    %v536 = vld [vmem:[#allocation4 + $0xda8] sm:$0xff]
    %v537 = vld [vmem:[#allocation4 + $0xdb0] sm:$0xff]
    %v538 = vld [vmem:[#allocation4 + $0xdb8] sm:$0xff]
    %v539 = vld [vmem:[#allocation4 + $0xdc0] sm:$0xff]
    %v540 = vld [vmem:[#allocation4 + $0xdc8] sm:$0xff]
    %vm541 = vcmask 654336
    %v543 = vsel %vm541, %v70, 0
    %v546 = vsel %vm541, %v98, 0
    %548 = vmatpush.msra.mxu0 %v114
    %549 = vmatpush.msra.mxu0 %v113
    %550 = vmatpush.msra.mxu0 %v112
    %551 = vmatpush.msra.mxu0 %v111
    %552 = vmatpush.msra.mxu0 %v110
    %553 = vmatpush.msra.mxu0 %v109
    %554 = vmatpush.msra.mxu0 %v108
    %555 = vmatpush.msra.mxu0 %v107
    %556 = vmatpush.msra.mxu0 %v106
    %557 = vmatpush.msra.mxu0 %v105
    %558 = vmatpush.msra.mxu0 %v104
    %559 = vmatpush.msra.mxu0 %v103
    %560 = vmatpush.msra.mxu0 %v102
    %561 = vmatpush.msra.mxu0 %v101
    %562 = vmatpush.msra.mxu0 %v100
    %563 = vmatpush.msra.mxu0 %v99
    %564 = vmatmul.f32.gmra.mxu0 %v43
    %v565 = vpop.f32.mrf.mxu0
    %v566 = vadd.f32 0.0, %v565
    %567 = vmatmul.f32.gmra.mxu0 %v71
    %v568 = vpop.f32.mrf.mxu0
    %v569 = vadd.f32 0.0, %v568
    %570 = vdwg.mxu0
    %571 = vmatpush.msra.mxu0 %v130
    %572 = vmatpush.msra.mxu0 %v129
    %573 = vmatpush.msra.mxu0 %v128
    %574 = vmatpush.msra.mxu0 %v127
    %575 = vmatpush.msra.mxu0 %v126
    %576 = vmatpush.msra.mxu0 %v125
    %577 = vmatpush.msra.mxu0 %v124
    %578 = vmatpush.msra.mxu0 %v123
    %579 = vmatpush.msra.mxu0 %v122
    %580 = vmatpush.msra.mxu0 %v121
    %581 = vmatpush.msra.mxu0 %v120
    %582 = vmatpush.msra.mxu0 %v119
    %583 = vmatpush.msra.mxu0 %v118
    %584 = vmatpush.msra.mxu0 %v117
    %585 = vmatpush.msra.mxu0 %v116
    %586 = vmatpush.msra.mxu0 %v115
    %587 = vmatmul.f32.gmra.mxu0 %v44
    %v588 = vpop.f32.mrf.mxu0
    %v589 = vadd.f32 %v566, %v588
    %590 = vmatmul.f32.gmra.mxu0 %v72
    %v591 = vpop.f32.mrf.mxu0
    %v592 = vadd.f32 %v569, %v591
    %593 = vdwg.mxu0
    %594 = vmatpush.msra.mxu0 %v146
    %595 = vmatpush.msra.mxu0 %v145
    %596 = vmatpush.msra.mxu0 %v144
    %597 = vmatpush.msra.mxu0 %v143
    %598 = vmatpush.msra.mxu0 %v142
    %599 = vmatpush.msra.mxu0 %v141
    %600 = vmatpush.msra.mxu0 %v140
    %601 = vmatpush.msra.mxu0 %v139
    %602 = vmatpush.msra.mxu0 %v138
    %603 = vmatpush.msra.mxu0 %v137
    %604 = vmatpush.msra.mxu0 %v136
    %605 = vmatpush.msra.mxu0 %v135
    %606 = vmatpush.msra.mxu0 %v134
    %607 = vmatpush.msra.mxu0 %v133
    %608 = vmatpush.msra.mxu0 %v132
    %609 = vmatpush.msra.mxu0 %v131
    %610 = vmatmul.f32.gmra.mxu0 %v45
    %v611 = vpop.f32.mrf.mxu0
    %v612 = vadd.f32 %v589, %v611
    %613 = vmatmul.f32.gmra.mxu0 %v73
    %v614 = vpop.f32.mrf.mxu0
    %v615 = vadd.f32 %v592, %v614
    %616 = vdwg.mxu0
    %617 = vmatpush.msra.mxu0 %v162
    %618 = vmatpush.msra.mxu0 %v161
    %619 = vmatpush.msra.mxu0 %v160
    %620 = vmatpush.msra.mxu0 %v159
    %621 = vmatpush.msra.mxu0 %v158
    %622 = vmatpush.msra.mxu0 %v157
    %623 = vmatpush.msra.mxu0 %v156
    %624 = vmatpush.msra.mxu0 %v155
    %625 = vmatpush.msra.mxu0 %v154
    %626 = vmatpush.msra.mxu0 %v153
    %627 = vmatpush.msra.mxu0 %v152
    %628 = vmatpush.msra.mxu0 %v151
    %629 = vmatpush.msra.mxu0 %v150
    %630 = vmatpush.msra.mxu0 %v149
    %631 = vmatpush.msra.mxu0 %v148
    %632 = vmatpush.msra.mxu0 %v147
    %633 = vmatmul.f32.gmra.mxu0 %v46
    %v634 = vpop.f32.mrf.mxu0
    %v635 = vadd.f32 %v612, %v634
    %636 = vmatmul.f32.gmra.mxu0 %v74
    %v637 = vpop.f32.mrf.mxu0
    %v638 = vadd.f32 %v615, %v637
    %639 = vdwg.mxu0
    %640 = vmatpush.msra.mxu0 %v178
    %641 = vmatpush.msra.mxu0 %v177
    %642 = vmatpush.msra.mxu0 %v176
    %643 = vmatpush.msra.mxu0 %v175
    %644 = vmatpush.msra.mxu0 %v174
    %645 = vmatpush.msra.mxu0 %v173
    %646 = vmatpush.msra.mxu0 %v172
    %647 = vmatpush.msra.mxu0 %v171
    %648 = vmatpush.msra.mxu0 %v170
    %649 = vmatpush.msra.mxu0 %v169
    %650 = vmatpush.msra.mxu0 %v168
    %651 = vmatpush.msra.mxu0 %v167
    %652 = vmatpush.msra.mxu0 %v166
    %653 = vmatpush.msra.mxu0 %v165
    %654 = vmatpush.msra.mxu0 %v164
    %655 = vmatpush.msra.mxu0 %v163
    %656 = vmatmul.f32.gmra.mxu0 %v47
    %v657 = vpop.f32.mrf.mxu0
    %v658 = vadd.f32 %v635, %v657
    %659 = vmatmul.f32.gmra.mxu0 %v75
    %v660 = vpop.f32.mrf.mxu0
    %v661 = vadd.f32 %v638, %v660
    %662 = vdwg.mxu0
    %663 = vmatpush.msra.mxu0 %v194
    %664 = vmatpush.msra.mxu0 %v193
    %665 = vmatpush.msra.mxu0 %v192
    %666 = vmatpush.msra.mxu0 %v191
    %667 = vmatpush.msra.mxu0 %v190
    %668 = vmatpush.msra.mxu0 %v189
    %669 = vmatpush.msra.mxu0 %v188
    %670 = vmatpush.msra.mxu0 %v187
    %671 = vmatpush.msra.mxu0 %v186
    %672 = vmatpush.msra.mxu0 %v185
    %673 = vmatpush.msra.mxu0 %v184
    %674 = vmatpush.msra.mxu0 %v183
    %675 = vmatpush.msra.mxu0 %v182
    %676 = vmatpush.msra.mxu0 %v181
    %677 = vmatpush.msra.mxu0 %v180
    %678 = vmatpush.msra.mxu0 %v179
    %679 = vmatmul.f32.gmra.mxu0 %v48
    %v680 = vpop.f32.mrf.mxu0
    %v681 = vadd.f32 %v658, %v680
    %682 = vmatmul.f32.gmra.mxu0 %v76
    %v683 = vpop.f32.mrf.mxu0
    %v684 = vadd.f32 %v661, %v683
    %685 = vdwg.mxu0
    %686 = vmatpush.msra.mxu0 %v210
    %687 = vmatpush.msra.mxu0 %v209
    %688 = vmatpush.msra.mxu0 %v208
    %689 = vmatpush.msra.mxu0 %v207
    %690 = vmatpush.msra.mxu0 %v206
    %691 = vmatpush.msra.mxu0 %v205
    %692 = vmatpush.msra.mxu0 %v204
    %693 = vmatpush.msra.mxu0 %v203
    %694 = vmatpush.msra.mxu0 %v202
    %695 = vmatpush.msra.mxu0 %v201
    %696 = vmatpush.msra.mxu0 %v200
    %697 = vmatpush.msra.mxu0 %v199
    %698 = vmatpush.msra.mxu0 %v198
    %699 = vmatpush.msra.mxu0 %v197
    %700 = vmatpush.msra.mxu0 %v196
    %701 = vmatpush.msra.mxu0 %v195
    %702 = vmatmul.f32.gmra.mxu0 %v49
    %v703 = vpop.f32.mrf.mxu0
    %v704 = vadd.f32 %v681, %v703
    %705 = vmatmul.f32.gmra.mxu0 %v77
    %v706 = vpop.f32.mrf.mxu0
    %v707 = vadd.f32 %v684, %v706
    %708 = vdwg.mxu0
    %709 = vmatpush.msra.mxu0 %v226
    %710 = vmatpush.msra.mxu0 %v225
    %711 = vmatpush.msra.mxu0 %v224
    %712 = vmatpush.msra.mxu0 %v223
    %713 = vmatpush.msra.mxu0 %v222
    %714 = vmatpush.msra.mxu0 %v221
    %715 = vmatpush.msra.mxu0 %v220
    %716 = vmatpush.msra.mxu0 %v219
    %717 = vmatpush.msra.mxu0 %v218
    %718 = vmatpush.msra.mxu0 %v217
    %719 = vmatpush.msra.mxu0 %v216
    %720 = vmatpush.msra.mxu0 %v215
    %721 = vmatpush.msra.mxu0 %v214
    %722 = vmatpush.msra.mxu0 %v213
    %723 = vmatpush.msra.mxu0 %v212
    %724 = vmatpush.msra.mxu0 %v211
    %725 = vmatmul.f32.gmra.mxu0 %v50
    %v726 = vpop.f32.mrf.mxu0
    %v727 = vadd.f32 %v704, %v726
    %728 = vmatmul.f32.gmra.mxu0 %v78
    %v729 = vpop.f32.mrf.mxu0
    %v730 = vadd.f32 %v707, %v729
    %731 = vdwg.mxu0
    %732 = vmatpush.msra.mxu0 %v242
    %733 = vmatpush.msra.mxu0 %v241
    %734 = vmatpush.msra.mxu0 %v240
    %735 = vmatpush.msra.mxu0 %v239
    %736 = vmatpush.msra.mxu0 %v238
    %737 = vmatpush.msra.mxu0 %v237
    %738 = vmatpush.msra.mxu0 %v236
    %739 = vmatpush.msra.mxu0 %v235
    %740 = vmatpush.msra.mxu0 %v234
    %741 = vmatpush.msra.mxu0 %v233
    %742 = vmatpush.msra.mxu0 %v232
    %743 = vmatpush.msra.mxu0 %v231
    %744 = vmatpush.msra.mxu0 %v230
    %745 = vmatpush.msra.mxu0 %v229
    %746 = vmatpush.msra.mxu0 %v228
    %747 = vmatpush.msra.mxu0 %v227
    %748 = vmatmul.f32.gmra.mxu0 %v51
    %v749 = vpop.f32.mrf.mxu0
    %v750 = vadd.f32 %v727, %v749
    %751 = vmatmul.f32.gmra.mxu0 %v79
    %v752 = vpop.f32.mrf.mxu0
    %v753 = vadd.f32 %v730, %v752
    %754 = vdwg.mxu0
    %755 = vmatpush.msra.mxu0 %v258
    %756 = vmatpush.msra.mxu0 %v257
    %757 = vmatpush.msra.mxu0 %v256
    %758 = vmatpush.msra.mxu0 %v255
    %759 = vmatpush.msra.mxu0 %v254
    %760 = vmatpush.msra.mxu0 %v253
    %761 = vmatpush.msra.mxu0 %v252
    %762 = vmatpush.msra.mxu0 %v251
    %763 = vmatpush.msra.mxu0 %v250
    %764 = vmatpush.msra.mxu0 %v249
    %765 = vmatpush.msra.mxu0 %v248
    %766 = vmatpush.msra.mxu0 %v247
    %767 = vmatpush.msra.mxu0 %v246
    %768 = vmatpush.msra.mxu0 %v245
    %769 = vmatpush.msra.mxu0 %v244
    %770 = vmatpush.msra.mxu0 %v243
    %771 = vmatmul.f32.gmra.mxu0 %v52
    %v772 = vpop.f32.mrf.mxu0
    %v773 = vadd.f32 %v750, %v772
    %774 = vmatmul.f32.gmra.mxu0 %v80
    %v775 = vpop.f32.mrf.mxu0
    %v776 = vadd.f32 %v753, %v775
    %777 = vdwg.mxu0
    %778 = vmatpush.msra.mxu0 %v274
    %779 = vmatpush.msra.mxu0 %v273
    %780 = vmatpush.msra.mxu0 %v272
    %781 = vmatpush.msra.mxu0 %v271
    %782 = vmatpush.msra.mxu0 %v270
    %783 = vmatpush.msra.mxu0 %v269
    %784 = vmatpush.msra.mxu0 %v268
    %785 = vmatpush.msra.mxu0 %v267
    %786 = vmatpush.msra.mxu0 %v266
    %787 = vmatpush.msra.mxu0 %v265
    %788 = vmatpush.msra.mxu0 %v264
    %789 = vmatpush.msra.mxu0 %v263
    %790 = vmatpush.msra.mxu0 %v262
    %791 = vmatpush.msra.mxu0 %v261
    %792 = vmatpush.msra.mxu0 %v260
    %793 = vmatpush.msra.mxu0 %v259
    %794 = vmatmul.f32.gmra.mxu0 %v53
    %v795 = vpop.f32.mrf.mxu0
    %v796 = vadd.f32 %v773, %v795
    %797 = vmatmul.f32.gmra.mxu0 %v81
    %v798 = vpop.f32.mrf.mxu0
    %v799 = vadd.f32 %v776, %v798
    %800 = vdwg.mxu0
    %801 = vmatpush.msra.mxu0 %v290
    %802 = vmatpush.msra.mxu0 %v289
    %803 = vmatpush.msra.mxu0 %v288
    %804 = vmatpush.msra.mxu0 %v287
    %805 = vmatpush.msra.mxu0 %v286
    %806 = vmatpush.msra.mxu0 %v285
    %807 = vmatpush.msra.mxu0 %v284
    %808 = vmatpush.msra.mxu0 %v283
    %809 = vmatpush.msra.mxu0 %v282
    %810 = vmatpush.msra.mxu0 %v281
    %811 = vmatpush.msra.mxu0 %v280
    %812 = vmatpush.msra.mxu0 %v279
    %813 = vmatpush.msra.mxu0 %v278
    %814 = vmatpush.msra.mxu0 %v277
    %815 = vmatpush.msra.mxu0 %v276
    %816 = vmatpush.msra.mxu0 %v275
    %817 = vmatmul.f32.gmra.mxu0 %v54
    %v818 = vpop.f32.mrf.mxu0
    %v819 = vadd.f32 %v796, %v818
    %820 = vmatmul.f32.gmra.mxu0 %v82
    %v821 = vpop.f32.mrf.mxu0
    %v822 = vadd.f32 %v799, %v821
    %823 = vdwg.mxu0
    %824 = vmatpush.msra.mxu0 %v306
    %825 = vmatpush.msra.mxu0 %v305
    %826 = vmatpush.msra.mxu0 %v304
    %827 = vmatpush.msra.mxu0 %v303
    %828 = vmatpush.msra.mxu0 %v302
    %829 = vmatpush.msra.mxu0 %v301
    %830 = vmatpush.msra.mxu0 %v300
    %831 = vmatpush.msra.mxu0 %v299
    %832 = vmatpush.msra.mxu0 %v298
    %833 = vmatpush.msra.mxu0 %v297
    %834 = vmatpush.msra.mxu0 %v296
    %835 = vmatpush.msra.mxu0 %v295
    %836 = vmatpush.msra.mxu0 %v294
    %837 = vmatpush.msra.mxu0 %v293
    %838 = vmatpush.msra.mxu0 %v292
    %839 = vmatpush.msra.mxu0 %v291
    %840 = vmatmul.f32.gmra.mxu0 %v55
    %v841 = vpop.f32.mrf.mxu0
    %v842 = vadd.f32 %v819, %v841
    %843 = vmatmul.f32.gmra.mxu0 %v83
    %v844 = vpop.f32.mrf.mxu0
    %v845 = vadd.f32 %v822, %v844
    %846 = vdwg.mxu0
    %847 = vmatpush.msra.mxu0 %v322
    %848 = vmatpush.msra.mxu0 %v321
    %849 = vmatpush.msra.mxu0 %v320
    %850 = vmatpush.msra.mxu0 %v319
    %851 = vmatpush.msra.mxu0 %v318
    %852 = vmatpush.msra.mxu0 %v317
    %853 = vmatpush.msra.mxu0 %v316
    %854 = vmatpush.msra.mxu0 %v315
    %855 = vmatpush.msra.mxu0 %v314
    %856 = vmatpush.msra.mxu0 %v313
    %857 = vmatpush.msra.mxu0 %v312
    %858 = vmatpush.msra.mxu0 %v311
    %859 = vmatpush.msra.mxu0 %v310
    %860 = vmatpush.msra.mxu0 %v309
    %861 = vmatpush.msra.mxu0 %v308
    %862 = vmatpush.msra.mxu0 %v307
    %863 = vmatmul.f32.gmra.mxu0 %v56
    %v864 = vpop.f32.mrf.mxu0
    %v865 = vadd.f32 %v842, %v864
    %866 = vmatmul.f32.gmra.mxu0 %v84
    %v867 = vpop.f32.mrf.mxu0
    %v868 = vadd.f32 %v845, %v867
    %869 = vdwg.mxu0
    %870 = vmatpush.msra.mxu0 %v338
    %871 = vmatpush.msra.mxu0 %v337
    %872 = vmatpush.msra.mxu0 %v336
    %873 = vmatpush.msra.mxu0 %v335
    %874 = vmatpush.msra.mxu0 %v334
    %875 = vmatpush.msra.mxu0 %v333
    %876 = vmatpush.msra.mxu0 %v332
    %877 = vmatpush.msra.mxu0 %v331
    %878 = vmatpush.msra.mxu0 %v330
    %879 = vmatpush.msra.mxu0 %v329
    %880 = vmatpush.msra.mxu0 %v328
    %881 = vmatpush.msra.mxu0 %v327
    %882 = vmatpush.msra.mxu0 %v326
    %883 = vmatpush.msra.mxu0 %v325
    %884 = vmatpush.msra.mxu0 %v324
    %885 = vmatpush.msra.mxu0 %v323
    %886 = vmatmul.f32.gmra.mxu0 %v57
    %v887 = vpop.f32.mrf.mxu0
    %v888 = vadd.f32 %v865, %v887
    %889 = vmatmul.f32.gmra.mxu0 %v85
    %v890 = vpop.f32.mrf.mxu0
    %v891 = vadd.f32 %v868, %v890
    %892 = vdwg.mxu0
    %893 = vmatpush.msra.mxu0 %v354
    %894 = vmatpush.msra.mxu0 %v353
    %895 = vmatpush.msra.mxu0 %v352
    %896 = vmatpush.msra.mxu0 %v351
    %897 = vmatpush.msra.mxu0 %v350
    %898 = vmatpush.msra.mxu0 %v349
    %899 = vmatpush.msra.mxu0 %v348
    %900 = vmatpush.msra.mxu0 %v347
    %901 = vmatpush.msra.mxu0 %v346
    %902 = vmatpush.msra.mxu0 %v345
    %903 = vmatpush.msra.mxu0 %v344
    %904 = vmatpush.msra.mxu0 %v343
    %905 = vmatpush.msra.mxu0 %v342
    %906 = vmatpush.msra.mxu0 %v341
    %907 = vmatpush.msra.mxu0 %v340
    %908 = vmatpush.msra.mxu0 %v339
    %909 = vmatmul.f32.gmra.mxu0 %v58
    %v910 = vpop.f32.mrf.mxu0
    %v911 = vadd.f32 %v888, %v910
    %912 = vmatmul.f32.gmra.mxu0 %v86
    %v913 = vpop.f32.mrf.mxu0
    %v914 = vadd.f32 %v891, %v913
    %915 = vdwg.mxu0
    %916 = vmatpush.msra.mxu0 %v370
    %917 = vmatpush.msra.mxu0 %v369
    %918 = vmatpush.msra.mxu0 %v368
    %919 = vmatpush.msra.mxu0 %v367
    %920 = vmatpush.msra.mxu0 %v366
    %921 = vmatpush.msra.mxu0 %v365
    %922 = vmatpush.msra.mxu0 %v364
    %923 = vmatpush.msra.mxu0 %v363
    %924 = vmatpush.msra.mxu0 %v362
    %925 = vmatpush.msra.mxu0 %v361
    %926 = vmatpush.msra.mxu0 %v360
    %927 = vmatpush.msra.mxu0 %v359
    %928 = vmatpush.msra.mxu0 %v358
    %929 = vmatpush.msra.mxu0 %v357
    %930 = vmatpush.msra.mxu0 %v356
    %931 = vmatpush.msra.mxu0 %v355
    %932 = vmatmul.f32.gmra.mxu0 %v59
    %v933 = vpop.f32.mrf.mxu0
    %v934 = vadd.f32 %v911, %v933
    %935 = vmatmul.f32.gmra.mxu0 %v87
    %v936 = vpop.f32.mrf.mxu0
    %v937 = vadd.f32 %v914, %v936
    %938 = vdwg.mxu0
    %939 = vmatpush.msra.mxu0 %v386
    %940 = vmatpush.msra.mxu0 %v385
    %941 = vmatpush.msra.mxu0 %v384
    %942 = vmatpush.msra.mxu0 %v383
    %943 = vmatpush.msra.mxu0 %v382
    %944 = vmatpush.msra.mxu0 %v381
    %945 = vmatpush.msra.mxu0 %v380
    %946 = vmatpush.msra.mxu0 %v379
    %947 = vmatpush.msra.mxu0 %v378
    %948 = vmatpush.msra.mxu0 %v377
    %949 = vmatpush.msra.mxu0 %v376
    %950 = vmatpush.msra.mxu0 %v375
    %951 = vmatpush.msra.mxu0 %v374
    %952 = vmatpush.msra.mxu0 %v373
    %953 = vmatpush.msra.mxu0 %v372
    %954 = vmatpush.msra.mxu0 %v371
    %955 = vmatmul.f32.gmra.mxu0 %v60
    %v956 = vpop.f32.mrf.mxu0
    %v957 = vadd.f32 %v934, %v956
    %958 = vmatmul.f32.gmra.mxu0 %v88
    %v959 = vpop.f32.mrf.mxu0
    %v960 = vadd.f32 %v937, %v959
    %961 = vdwg.mxu0
    %962 = vmatpush.msra.mxu0 %v402
    %963 = vmatpush.msra.mxu0 %v401
    %964 = vmatpush.msra.mxu0 %v400
    %965 = vmatpush.msra.mxu0 %v399
    %966 = vmatpush.msra.mxu0 %v398
    %967 = vmatpush.msra.mxu0 %v397
    %968 = vmatpush.msra.mxu0 %v396
    %969 = vmatpush.msra.mxu0 %v395
    %970 = vmatpush.msra.mxu0 %v394
    %971 = vmatpush.msra.mxu0 %v393
    %972 = vmatpush.msra.mxu0 %v392
    %973 = vmatpush.msra.mxu0 %v391
    %974 = vmatpush.msra.mxu0 %v390
    %975 = vmatpush.msra.mxu0 %v389
    %976 = vmatpush.msra.mxu0 %v388
    %977 = vmatpush.msra.mxu0 %v387
    %978 = vmatmul.f32.gmra.mxu0 %v61
    %v979 = vpop.f32.mrf.mxu0
    %v980 = vadd.f32 %v957, %v979
    %981 = vmatmul.f32.gmra.mxu0 %v89
    %v982 = vpop.f32.mrf.mxu0
    %v983 = vadd.f32 %v960, %v982
    %984 = vdwg.mxu0
    %985 = vmatpush.msra.mxu0 %v418
    %986 = vmatpush.msra.mxu0 %v417
    %987 = vmatpush.msra.mxu0 %v416
    %988 = vmatpush.msra.mxu0 %v415
    %989 = vmatpush.msra.mxu0 %v414
    %990 = vmatpush.msra.mxu0 %v413
    %991 = vmatpush.msra.mxu0 %v412
    %992 = vmatpush.msra.mxu0 %v411
    %993 = vmatpush.msra.mxu0 %v410
    %994 = vmatpush.msra.mxu0 %v409
    %995 = vmatpush.msra.mxu0 %v408
    %996 = vmatpush.msra.mxu0 %v407
    %997 = vmatpush.msra.mxu0 %v406
    %998 = vmatpush.msra.mxu0 %v405
    %999 = vmatpush.msra.mxu0 %v404
    %1000 = vmatpush.msra.mxu0 %v403
    %1001 = vmatmul.f32.gmra.mxu0 %v62
    %v1002 = vpop.f32.mrf.mxu0
    %v1003 = vadd.f32 %v980, %v1002
    %1004 = vmatmul.f32.gmra.mxu0 %v90
    %v1005 = vpop.f32.mrf.mxu0
    %v1006 = vadd.f32 %v983, %v1005
    %1007 = vdwg.mxu0
    %1008 = vmatpush.msra.mxu0 %v434
    %1009 = vmatpush.msra.mxu0 %v433
    %1010 = vmatpush.msra.mxu0 %v432
    %1011 = vmatpush.msra.mxu0 %v431
    %1012 = vmatpush.msra.mxu0 %v430
    %1013 = vmatpush.msra.mxu0 %v429
    %1014 = vmatpush.msra.mxu0 %v428
    %1015 = vmatpush.msra.mxu0 %v427
    %1016 = vmatpush.msra.mxu0 %v426
    %1017 = vmatpush.msra.mxu0 %v425
    %1018 = vmatpush.msra.mxu0 %v424
    %1019 = vmatpush.msra.mxu0 %v423
    %1020 = vmatpush.msra.mxu0 %v422
    %1021 = vmatpush.msra.mxu0 %v421
    %1022 = vmatpush.msra.mxu0 %v420
    %1023 = vmatpush.msra.mxu0 %v419
    %1024 = vmatmul.f32.gmra.mxu0 %v63
    %v1025 = vpop.f32.mrf.mxu0
    %v1026 = vadd.f32 %v1003, %v1025
    %1027 = vmatmul.f32.gmra.mxu0 %v91
    %v1028 = vpop.f32.mrf.mxu0
    %v1029 = vadd.f32 %v1006, %v1028
    %1030 = vdwg.mxu0
    %1031 = vmatpush.msra.mxu0 %v450
    %1032 = vmatpush.msra.mxu0 %v449
    %1033 = vmatpush.msra.mxu0 %v448
    %1034 = vmatpush.msra.mxu0 %v447
    %1035 = vmatpush.msra.mxu0 %v446
    %1036 = vmatpush.msra.mxu0 %v445
    %1037 = vmatpush.msra.mxu0 %v444
    %1038 = vmatpush.msra.mxu0 %v443
    %1039 = vmatpush.msra.mxu0 %v442
    %1040 = vmatpush.msra.mxu0 %v441
    %1041 = vmatpush.msra.mxu0 %v440
    %1042 = vmatpush.msra.mxu0 %v439
    %1043 = vmatpush.msra.mxu0 %v438
    %1044 = vmatpush.msra.mxu0 %v437
    %1045 = vmatpush.msra.mxu0 %v436
    %1046 = vmatpush.msra.mxu0 %v435
    %1047 = vmatmul.f32.gmra.mxu0 %v64
    %v1048 = vpop.f32.mrf.mxu0
    %v1049 = vadd.f32 %v1026, %v1048
    %1050 = vmatmul.f32.gmra.mxu0 %v92
    %v1051 = vpop.f32.mrf.mxu0
    %v1052 = vadd.f32 %v1029, %v1051
    %1053 = vdwg.mxu0
    %1054 = vmatpush.msra.mxu0 %v466
    %1055 = vmatpush.msra.mxu0 %v465
    %1056 = vmatpush.msra.mxu0 %v464
    %1057 = vmatpush.msra.mxu0 %v463
    %1058 = vmatpush.msra.mxu0 %v462
    %1059 = vmatpush.msra.mxu0 %v461
    %1060 = vmatpush.msra.mxu0 %v460
    %1061 = vmatpush.msra.mxu0 %v459
    %1062 = vmatpush.msra.mxu0 %v458
    %1063 = vmatpush.msra.mxu0 %v457
    %1064 = vmatpush.msra.mxu0 %v456
    %1065 = vmatpush.msra.mxu0 %v455
    %1066 = vmatpush.msra.mxu0 %v454
    %1067 = vmatpush.msra.mxu0 %v453
    %1068 = vmatpush.msra.mxu0 %v452
    %1069 = vmatpush.msra.mxu0 %v451
    %1070 = vmatmul.f32.gmra.mxu0 %v65
    %v1071 = vpop.f32.mrf.mxu0
    %v1072 = vadd.f32 %v1049, %v1071
    %1073 = vmatmul.f32.gmra.mxu0 %v93
    %v1074 = vpop.f32.mrf.mxu0
    %v1075 = vadd.f32 %v1052, %v1074
    %1076 = vdwg.mxu0
    %1077 = vmatpush.msra.mxu0 %v482
    %1078 = vmatpush.msra.mxu0 %v481
    %1079 = vmatpush.msra.mxu0 %v480
    %1080 = vmatpush.msra.mxu0 %v479
    %1081 = vmatpush.msra.mxu0 %v478
    %1082 = vmatpush.msra.mxu0 %v477
    %1083 = vmatpush.msra.mxu0 %v476
    %1084 = vmatpush.msra.mxu0 %v475
    %1085 = vmatpush.msra.mxu0 %v474
    %1086 = vmatpush.msra.mxu0 %v473
    %1087 = vmatpush.msra.mxu0 %v472
    %1088 = vmatpush.msra.mxu0 %v471
    %1089 = vmatpush.msra.mxu0 %v470
    %1090 = vmatpush.msra.mxu0 %v469
    %1091 = vmatpush.msra.mxu0 %v468
    %1092 = vmatpush.msra.mxu0 %v467
    %1093 = vmatmul.f32.gmra.mxu0 %v66
    %v1094 = vpop.f32.mrf.mxu0
    %v1095 = vadd.f32 %v1072, %v1094
    %1096 = vmatmul.f32.gmra.mxu0 %v94
    %v1097 = vpop.f32.mrf.mxu0
    %v1098 = vadd.f32 %v1075, %v1097
    %1099 = vdwg.mxu0
    %1100 = vmatpush.msra.mxu0 %v498
    %1101 = vmatpush.msra.mxu0 %v497
    %1102 = vmatpush.msra.mxu0 %v496
    %1103 = vmatpush.msra.mxu0 %v495
    %1104 = vmatpush.msra.mxu0 %v494
    %1105 = vmatpush.msra.mxu0 %v493
    %1106 = vmatpush.msra.mxu0 %v492
    %1107 = vmatpush.msra.mxu0 %v491
    %1108 = vmatpush.msra.mxu0 %v490
    %1109 = vmatpush.msra.mxu0 %v489
    %1110 = vmatpush.msra.mxu0 %v488
    %1111 = vmatpush.msra.mxu0 %v487
    %1112 = vmatpush.msra.mxu0 %v486
    %1113 = vmatpush.msra.mxu0 %v485
    %1114 = vmatpush.msra.mxu0 %v484
    %1115 = vmatpush.msra.mxu0 %v483
    %1116 = vmatmul.f32.gmra.mxu0 %v67
    %v1117 = vpop.f32.mrf.mxu0
    %v1118 = vadd.f32 %v1095, %v1117
    %1119 = vmatmul.f32.gmra.mxu0 %v95
    %v1120 = vpop.f32.mrf.mxu0
    %v1121 = vadd.f32 %v1098, %v1120
    %1122 = vdwg.mxu0
    %1123 = vmatpush.msra.mxu0 %v514
    %1124 = vmatpush.msra.mxu0 %v513
    %1125 = vmatpush.msra.mxu0 %v512
    %1126 = vmatpush.msra.mxu0 %v511
    %1127 = vmatpush.msra.mxu0 %v510
    %1128 = vmatpush.msra.mxu0 %v509
    %1129 = vmatpush.msra.mxu0 %v508
    %1130 = vmatpush.msra.mxu0 %v507
    %1131 = vmatpush.msra.mxu0 %v506
    %1132 = vmatpush.msra.mxu0 %v505
    %1133 = vmatpush.msra.mxu0 %v504
    %1134 = vmatpush.msra.mxu0 %v503
    %1135 = vmatpush.msra.mxu0 %v502
    %1136 = vmatpush.msra.mxu0 %v501
    %1137 = vmatpush.msra.mxu0 %v500
    %1138 = vmatpush.msra.mxu0 %v499
    %1139 = vmatmul.f32.gmra.mxu0 %v68
    %v1140 = vpop.f32.mrf.mxu0
    %v1141 = vadd.f32 %v1118, %v1140
    %1142 = vmatmul.f32.gmra.mxu0 %v96
    %v1143 = vpop.f32.mrf.mxu0
    %v1144 = vadd.f32 %v1121, %v1143
    %1145 = vdwg.mxu0
    %1146 = vmatpush.msra.mxu0 %v530
    %1147 = vmatpush.msra.mxu0 %v529
    %1148 = vmatpush.msra.mxu0 %v528
    %1149 = vmatpush.msra.mxu0 %v527
    %1150 = vmatpush.msra.mxu0 %v526
    %1151 = vmatpush.msra.mxu0 %v525
    %1152 = vmatpush.msra.mxu0 %v524
    %1153 = vmatpush.msra.mxu0 %v523
    %1154 = vmatpush.msra.mxu0 %v522
    %1155 = vmatpush.msra.mxu0 %v521
    %1156 = vmatpush.msra.mxu0 %v520
    %1157 = vmatpush.msra.mxu0 %v519
    %1158 = vmatpush.msra.mxu0 %v518
    %1159 = vmatpush.msra.mxu0 %v517
    %1160 = vmatpush.msra.mxu0 %v516
    %1161 = vmatpush.msra.mxu0 %v515
    %1162 = vmatmul.f32.gmra.mxu0 %v69
    %v1163 = vpop.f32.mrf.mxu0
    %v1164 = vadd.f32 %v1141, %v1163
    %1165 = vmatmul.f32.gmra.mxu0 %v97
    %v1166 = vpop.f32.mrf.mxu0
    %v1167 = vadd.f32 %v1144, %v1166
    %1168 = vdwg.mxu0
    %1169 = vmatpush.msra.mxu0 0.0
    %1170 = vmatpush.msra.mxu0 0.0
    %1171 = vmatpush.msra.mxu0 0.0
    %1172 = vmatpush.msra.mxu0 0.0
    %1173 = vmatpush.msra.mxu0 0.0
    %1174 = vmatpush.msra.mxu0 0.0
    %1175 = vmatpush.msra.mxu0 %v540
    %1176 = vmatpush.msra.mxu0 %v539
    %1177 = vmatpush.msra.mxu0 %v538
    %1178 = vmatpush.msra.mxu0 %v537
    %1179 = vmatpush.msra.mxu0 %v536
    %1180 = vmatpush.msra.mxu0 %v535
    %1181 = vmatpush.msra.mxu0 %v534
    %1182 = vmatpush.msra.mxu0 %v533
    %1183 = vmatpush.msra.mxu0 %v532
    %1184 = vmatpush.msra.mxu0 %v531
    %1185 = vmatmul.f32.gmra.mxu0 %v543
    %v1186 = vpop.f32.mrf.mxu0
    %v1187 = vadd.f32 %v1164, %v1186
    %1188 = vmatmul.f32.gmra.mxu0 %v546
    %v1189 = vpop.f32.mrf.mxu0
    %v1190 = vadd.f32 %v1167, %v1189
    %1191 = vdwg.mxu0
    %1192 = vst [vmem:[%s2] sm:$0xff] %v1187
    %1193 = vst [vmem:[%s2 + $0x8] sm:$0xff] %v1190
    // Predicated region
    $region18: #{_embedding_forward_impl.1} parent=1 // pred_check
      _
    $region19: #{_embedding_forward_impl.1} parent=1 // pred_check_branch
      %1195 = sbr.rel (0) target = $region21
    $region20: #{_embedding_forward_impl.1} parent=1 // pred_region
      _
    $region21: #{_embedding_forward_impl.1} parent=1 // pred_fallthru
      _
    // Predicated region
    $region22: #{_embedding_forward_impl.1} parent=1 // pred_check
      _
    $region23: #{_embedding_forward_impl.1} parent=1 // pred_check_branch
      %1197 = sbr.rel (0) target = $region25
    $region24: #{_embedding_forward_impl.1} parent=1 // pred_region
      _
    $region25: #{_embedding_forward_impl.1} parent=1 // pred_fallthru
      _
    %1198 = vsyncpa [#allocation3], 1
    %1199 = vsyncpa [#allocation5], 1

</llo_original>
